<compile_context>
chip_gen: v7x
topology: tpu7x:2x2x1
jax: 0.10.0
libtpu: 0.0.40
codegen_flags: <defaults>
</compile_context>

<pallas_src>
import functools

import numpy as np
import jax
import jax.numpy as jnp
from jax.experimental import pallas as pl
from jax.experimental.pallas import tpu as pltpu
from scipy.optimize import linear_sum_assignment


def _round_up(x, m):
    return ((x + m - 1) // m) * m


def _cost_matrix_kernel(x_ref, idc_ref, idl_ref, idr_ref, c_ref,
                        *, nc, k_pad, t_pad, w_class, w_span):
    # x_ref: [row_tile, K_pad]  with lanes [0,nc) = class logits,
    #        [nc, nc+seq) = left scores, [nc+seq, nc+2seq) = right scores,
    #        remaining lanes zero padding.
    x = x_ref[...].astype(jnp.float32)

    lane = jax.lax.broadcasted_iota(jnp.int32, x.shape, 1)
    is_class = lane < nc

    # Stable softmax restricted to the class lanes (masked lanes -> prob 0).
    masked = jnp.where(is_class, x, -1e30)
    m = jnp.max(masked, axis=-1, keepdims=True)
    e = jnp.exp(masked - m)
    inv_denom = pl.reciprocal(jnp.sum(e, axis=-1, keepdims=True), approx=True)
    prob = e * inv_denom

    # Fused LHS: class lanes carry probabilities, span lanes carry raw scores.
    lhs = jnp.where(is_class, prob, x).astype(jnp.bfloat16)

    # Build the weight-folded selection matrix in-kernel from the (block-offset)
    # target indices.  Padded target columns carry index -1 -> all-zero column.
    kk = jax.lax.broadcasted_iota(jnp.int32, (k_pad, t_pad), 0)
    sel = (jnp.where(kk == idc_ref[...], -w_class, 0.0)
           + jnp.where(kk == idl_ref[...], -w_span, 0.0)
           + jnp.where(kk == idr_ref[...], -w_span, 0.0)).astype(jnp.bfloat16)

    # Single MXU matmul writes the finished cost tile (no post-combine).
    c_ref[...] = jnp.dot(lhs, sel, preferred_element_type=jnp.float32)


def compute_cost_matrix(pred_logits, pred_left, pred_right,
                        gt_ids, gt_left, gt_right,
                        cost_class=1.0, cost_span=1.0, row_tile=None):
    """Returns C with shape [bs, num_queries, T] (T = total targets)."""
    bs, nq, nc = pred_logits.shape
    seq_len = pred_left.shape[-1]
    T = int(gt_ids.shape[0])
    N = bs * nq

    K = nc + 2 * seq_len
    K_pad = _round_up(K, 128)
    T_pad = _round_up(T, 128)          # lane-dense output store

    if row_tile is None:
        # 512 rows amortizes per-step overhead at production sizes while
        # staying within scoped VMEM; toy sizes collapse to a single step.
        # TODO(synk): re-derive the row tile / vmem_limit_bytes per generation
        # (v7x has 64 MiB physical VMEM) for production N / T.
        row_tile = min(512, _round_up(N, 8))
    N_pad = _round_up(N, row_tile)

    # Host-side glue: concatenate [logits | left | right] and zero-pad.
    x = jnp.concatenate(
        [pred_logits.reshape(N, nc).astype(jnp.float32),
         pred_left.reshape(N, seq_len).astype(jnp.float32),
         pred_right.reshape(N, seq_len).astype(jnp.float32)],
        axis=-1)
    x = jnp.pad(x, ((0, N_pad - N), (0, K_pad - K)))

    def _pad_ids(ids, offset):
        ids = ids.astype(jnp.int32) + offset
        ids = jnp.pad(ids, (0, T_pad - T), constant_values=-1)
        return ids.reshape(1, T_pad)

    idc = _pad_ids(gt_ids, 0)                 # class block rows [0, nc)
    idl = _pad_ids(gt_left, nc)               # left  block rows [nc, nc+seq)
    idr = _pad_ids(gt_right, nc + seq_len)    # right block rows [nc+seq, K)

    kernel = functools.partial(_cost_matrix_kernel,
                               nc=nc, k_pad=K_pad, t_pad=T_pad,
                               w_class=float(cost_class),
                               w_span=float(cost_span))

    C_pad = pl.pallas_call(
        kernel,
        out_shape=jax.ShapeDtypeStruct((N_pad, T_pad), jnp.float32),
        grid=(N_pad // row_tile,),
        in_specs=[
            pl.BlockSpec((row_tile, K_pad), lambda i: (i, 0)),  # x (row tiled)
            pl.BlockSpec((1, T_pad), lambda i: (0, 0)),          # idc (resident)
            pl.BlockSpec((1, T_pad), lambda i: (0, 0)),          # idl (resident)
            pl.BlockSpec((1, T_pad), lambda i: (0, 0)),          # idr (resident)
        ],
        out_specs=pl.BlockSpec((row_tile, T_pad), lambda i: (i, 0)),
        compiler_params=pltpu.CompilerParams(
            dimension_semantics=("parallel",)),
    )(x, idc, idl, idr)

    return C_pad[:N, :T].reshape(bs, nq, T)


def hungarian_matcher(outputs, targets, cost_class=1.0, cost_span=1.0):
    """JAX/Pallas equivalent of HungarianMatcher.forward (solver='hungarian')."""
    C = compute_cost_matrix(outputs["pred_logits"],
                            outputs["pred_left"],
                            outputs["pred_right"],
                            targets["labels"],
                            targets["gt_left"],
                            targets["gt_right"],
                            cost_class=cost_class,
                            cost_span=cost_span)
    C = jax.block_until_ready(C)
    C_np = np.asarray(C)
    sizes = targets["sizes"]

    # TODO(synk): linear_sum_assignment is sequential, data-dependent control
    # flow with no clean Pallas equivalent; solved on host as in the original.
    # TODO(synk): for large batches, compute only the per-batch block-diagonal
    # of C (per-batch target offsets via scalar prefetch) and D2H-transfer only
    # those slices to cut compute + host copy by ~bs x.
    indices = []
    offset = 0
    for b, size in enumerate(sizes):
        sub = C_np[b, :, offset:offset + size]
        i, j = linear_sum_assignment(sub)
        indices.append((np.asarray(i, dtype=np.int64),
                        np.asarray(j, dtype=np.int64)))
        offset += size
    return indices, C


def _reference_cost_matrix(outputs, targets, cost_class=1.0, cost_span=1.0):
    """Pure-JAX f32 reference mirroring the PyTorch semantics."""
    bs, nq, _ = outputs["pred_logits"].shape
    out_prob = jnp.exp(jax.nn.log_softmax(
        outputs["pred_logits"].reshape(bs * nq, -1), axis=-1))
    left = outputs["pred_left"].reshape(bs * nq, -1)
    right = outputs["pred_right"].reshape(bs * nq, -1)
    cc = -out_prob[:, targets["labels"]]
    cs = -(left[:, targets["gt_left"]] + right[:, targets["gt_right"]])
    C = cost_span * cs + cost_class * cc
    return C.reshape(bs, nq, -1)


if __name__ == "__main__":
    key = jax.random.PRNGKey(0)
    bs, num_queries, num_classes, seq_len = 2, 8, 16, 16
    sizes = [3, 5]                       # targets per batch element
    T = sum(sizes)

    k1, k2, k3, k4, k5, k6 = jax.random.split(key, 6)
    outputs = {
        "pred_logits": jax.random.normal(k1, (bs, num_queries, num_classes),
                                         dtype=jnp.float32),
        "pred_left": jax.random.normal(k2, (bs, num_queries, seq_len),
                                       dtype=jnp.float32),
        "pred_right": jax.random.normal(k3, (bs, num_queries, seq_len),
                                        dtype=jnp.float32),
    }
    targets = {
        "labels": jax.random.randint(k4, (T,), 0, num_classes, dtype=jnp.int32),
        "gt_left": jax.random.randint(k5, (T,), 0, seq_len, dtype=jnp.int32),
        "gt_right": jax.random.randint(k6, (T,), 0, seq_len, dtype=jnp.int32),
        "sizes": sizes,
    }

    indices, C_kernel = hungarian_matcher(outputs, targets,
                                          cost_class=1.0, cost_span=1.0)
    C_kernel = jax.block_until_ready(C_kernel)

    # Correctness check against the pure-JAX f32 reference.  Tolerance is
    # loosened because the kernel runs the fused matmul in bf16 (MXU-native)
    # with an approx EUP reciprocal in the softmax.
    C_ref = _reference_cost_matrix(outputs, targets)
    np.testing.assert_allclose(np.asarray(C_kernel), np.asarray(C_ref),
                               rtol=2e-2, atol=5e-2)

    # Sanity: assignment sizes match min(num_queries, size).
    for (i, j), size in zip(indices, sizes):
        assert len(i) == len(j) == min(num_queries, size)
        assert i.dtype == np.int64 and j.dtype == np.int64

    print("KERNEL_OK")
</pallas_src>

<mosaic_0001>
module attributes {stable_mosaic.version = 11 : i64} {
  func.func @_cost_matrix_kernel(%arg0: i32, %arg1: memref<16x128xf32, #tpu.memory_space<vmem>>, %arg2: memref<1x128xi32, #tpu.memory_space<vmem>>, %arg3: memref<1x128xi32, #tpu.memory_space<vmem>>, %arg4: memref<1x128xi32, #tpu.memory_space<vmem>>, %arg5: memref<16x128xf32, #tpu.memory_space<vmem>>) attributes {dimension_semantics = [#tpu.dimension_semantics<parallel>], iteration_bounds = array<i64: 1>, scalar_prefetch = 0 : i64, scratch_operands = 0 : i64, tpu.core_type = #tpu.core_type<tc>, window_params = [{transform_indices = @transform_0, window_bounds = array<i64: 16, 128>}, {pipeline_mode = #tpu.pipeline_mode<synchronous>, transform_indices = @transform_1, window_bounds = array<i64: 1, 128>}, {pipeline_mode = #tpu.pipeline_mode<synchronous>, transform_indices = @transform_2, window_bounds = array<i64: 1, 128>}, {pipeline_mode = #tpu.pipeline_mode<synchronous>, transform_indices = @transform_3, window_bounds = array<i64: 1, 128>}, {transform_indices = @transform_4, window_bounds = array<i64: 16, 128>}]} {
    %c0 = arith.constant 0 : index
    %c0_0 = arith.constant 0 : index
    %0 = vector.load %arg1[%c0, %c0_0] : memref<16x128xf32, #tpu.memory_space<vmem>>, vector<16x128xf32>
    %1 = tpu.iota {dimensions = array<i32: 1>} : vector<16x128xi32>
    %c16_i32 = arith.constant 16 : i32
    %2 = vector.broadcast %c16_i32 : i32 to vector<16x128xi32>
    %3 = arith.cmpi slt, %1, %2 : vector<16x128xi32>
    %cst = arith.constant -1.000000e+30 : f32
    %4 = vector.broadcast %cst : f32 to vector<16x128xf32>
    %5 = arith.select %3, %0, %4 : vector<16x128xi1>, vector<16x128xf32>
    %cst_1 = arith.constant dense<0xFF800000> : vector<16xf32>
    %6 = vector.multi_reduction <maximumf>, %5, %cst_1 [1] : vector<16x128xf32> to vector<16xf32>
    %7 = vector.shape_cast %6 : vector<16xf32> to vector<16x1xf32>
    %8 = vector.broadcast %7 : vector<16x1xf32> to vector<16x128xf32>
    %9 = arith.subf %5, %8 : vector<16x128xf32>
    %10 = math.exp %9 : vector<16x128xf32>
    %cst_2 = arith.constant dense<0.000000e+00> : vector<16xf32>
    %11 = vector.multi_reduction <add>, %10, %cst_2 [1] : vector<16x128xf32> to vector<16xf32>
    %12 = vector.shape_cast %11 : vector<16xf32> to vector<16x1xf32>
    %13 = tpu.reciprocal %12 {approx = true} : vector<16x1xf32> -> vector<16x1xf32>
    %14 = vector.broadcast %13 : vector<16x1xf32> to vector<16x128xf32>
    %15 = arith.mulf %10, %14 : vector<16x128xf32>
    %16 = arith.select %3, %15, %0 : vector<16x128xi1>, vector<16x128xf32>
    %17 = arith.truncf %16 : vector<16x128xf32> to vector<16x128xbf16>
    %18 = tpu.iota {dimensions = array<i32: 0>} : vector<128x128xi32>
    %c0_3 = arith.constant 0 : index
    %c0_4 = arith.constant 0 : index
    %19 = vector.load %arg2[%c0_3, %c0_4] : memref<1x128xi32, #tpu.memory_space<vmem>>, vector<1x128xi32>
    %20 = vector.broadcast %19 : vector<1x128xi32> to vector<128x128xi32>
    %21 = arith.cmpi eq, %18, %20 : vector<128x128xi32>
    %cst_5 = arith.constant -1.000000e+00 : f32
    %cst_6 = arith.constant 0.000000e+00 : f32
    %22 = vector.broadcast %cst_5 : f32 to vector<128x128xf32>
    %23 = vector.broadcast %cst_6 : f32 to vector<128x128xf32>
    %24 = arith.select %21, %22, %23 : vector<128x128xi1>, vector<128x128xf32>
    %c0_7 = arith.constant 0 : index
    %c0_8 = arith.constant 0 : index
    %25 = vector.load %arg3[%c0_7, %c0_8] : memref<1x128xi32, #tpu.memory_space<vmem>>, vector<1x128xi32>
    %26 = vector.broadcast %25 : vector<1x128xi32> to vector<128x128xi32>
    %27 = arith.cmpi eq, %18, %26 : vector<128x128xi32>
    %cst_9 = arith.constant -1.000000e+00 : f32
    %cst_10 = arith.constant 0.000000e+00 : f32
    %28 = vector.broadcast %cst_9 : f32 to vector<128x128xf32>
    %29 = vector.broadcast %cst_10 : f32 to vector<128x128xf32>
    %30 = arith.select %27, %28, %29 : vector<128x128xi1>, vector<128x128xf32>
    %31 = arith.addf %24, %30 : vector<128x128xf32>
    %c0_11 = arith.constant 0 : index
    %c0_12 = arith.constant 0 : index
    %32 = vector.load %arg4[%c0_11, %c0_12] : memref<1x128xi32, #tpu.memory_space<vmem>>, vector<1x128xi32>
    %33 = vector.broadcast %32 : vector<1x128xi32> to vector<128x128xi32>
    %34 = arith.cmpi eq, %18, %33 : vector<128x128xi32>
    %cst_13 = arith.constant -1.000000e+00 : f32
    %cst_14 = arith.constant 0.000000e+00 : f32
    %35 = vector.broadcast %cst_13 : f32 to vector<128x128xf32>
    %36 = vector.broadcast %cst_14 : f32 to vector<128x128xf32>
    %37 = arith.select %34, %35, %36 : vector<128x128xi1>, vector<128x128xf32>
    %38 = arith.addf %31, %37 : vector<128x128xf32>
    %39 = arith.truncf %38 : vector<128x128xf32> to vector<128x128xbf16>
    %cst_15 = arith.constant dense<0.000000e+00> : vector<16x128xf32>
    %40 = tpu.matmul %17, %39, %cst_15 {dimension_numbers = #tpu.dot_dimension_numbers<[1], [0], [0], [1], [0, 0, 1, 1], [], []>} : vector<16x128xbf16>, vector<128x128xbf16>, vector<16x128xf32> -> vector<16x128xf32>
    %c0_16 = arith.constant 0 : index
    %c0_17 = arith.constant 0 : index
    %41 = vector.load %arg5[%c0_16, %c0_17] : memref<16x128xf32, #tpu.memory_space<vmem>>, vector<16x128xf32>
    tpu.vector_store %arg5[%c0_16, %c0_17], %40 {strides = array<i32>} : memref<16x128xf32, #tpu.memory_space<vmem>>, vector<16x128xf32>,
    return
  }
  func.func @transform_0(%arg0: i32) -> (i32, i32) {
    %c0_i32 = arith.constant 0 : i32
    %c0_i32_0 = arith.constant 0 : i32
    return %arg0, %c0_i32 : i32, i32
  }
  func.func @transform_1(%arg0: i32) -> (i32, i32) {
    %c0_i32 = arith.constant 0 : i32
    %c0_i32_0 = arith.constant 0 : i32
    %c0_i32_1 = arith.constant 0 : i32
    return %c0_i32, %c0_i32_0 : i32, i32
  }
  func.func @transform_2(%arg0: i32) -> (i32, i32) {
    %c0_i32 = arith.constant 0 : i32
    %c0_i32_0 = arith.constant 0 : i32
    %c0_i32_1 = arith.constant 0 : i32
    return %c0_i32, %c0_i32_0 : i32, i32
  }
  func.func @transform_3(%arg0: i32) -> (i32, i32) {
    %c0_i32 = arith.constant 0 : i32
    %c0_i32_0 = arith.constant 0 : i32
    %c0_i32_1 = arith.constant 0 : i32
    return %c0_i32, %c0_i32_0 : i32, i32
  }
  func.func @transform_4(%arg0: i32) -> (i32, i32) {
    %c0_i32 = arith.constant 0 : i32
    %c0_i32_0 = arith.constant 0 : i32
    return %arg0, %c0_i32 : i32, i32
  }
}

</mosaic_0001>

<llo_original>
// kernel: tpu_custom_call.1
$region0: #{tpu_custom_call.1}
  #allocation0 [shape = 'u32[]', space=smem, size = 0x4, offset = 0x4, fixed_abs, tag = 'smem constant byte address 0x4 - core index']
  #allocation1 [shape = 'u32[144,128]{1,0:T(1,128)}', space=vmem, size = 0x12000, scoped, tag = 'internal scratch']
  %s0 = inlined_call_operand.hbm [shape: f32[16,128], index: 0, kind: input, shape index: {}]
  %s1 = inlined_call_operand.vmem [shape: s32[1,128], index: 1, kind: input, shape index: {}]
  %s2 = inlined_call_operand.vmem [shape: s32[1,128], index: 2, kind: input, shape index: {}]
  %s3 = inlined_call_operand.vmem [shape: s32[1,128], index: 3, kind: input, shape index: {}]
  %s4 = inlined_call_operand.hbm [shape: f32[16,128], index: 4, kind: output, shape index: {}]
  %s5 = sld [smem:[#allocation0]]
  $region30: #{tpu_custom_call.1} parent=0
    _
  %s7 = ssub.s32 1, %s5
  %s8 = scalar_select 0, %s7, %s5
  $region1: #{tpu_custom_call.1} parent=0
    #allocation2 [shape = 'u8[8192]{0}', space=vmem, size = 0x2000, scoped, tag = 'input window, operand 0, single buffered']
    #allocation3 [shape = 's32[1]{0}', space=sflag, size = 0x4, scoped, tag = 'scoped memory for tpu_custom_call.1']
    #allocation4 [shape = 's32[1]{0}', space=sflag, size = 0x4, scoped, tag = 'scoped memory for tpu_custom_call.1']
    #allocation5 [shape = 'u8[8192]{0}', space=vmem, size = 0x2000, scoped, tag = 'output window, operand 0, single buffered']
    %9 = vsyncpa [#allocation3], 0
    %10 = vsyncpa [#allocation4], 0
    // Predicated region
    $region2: #{tpu_custom_call.1} parent=1 // pred_check
      _
    $region3: #{tpu_custom_call.1} parent=1 // pred_check_branch
      %12 = sbr.rel (0) target = $region5
    $region4: #{tpu_custom_call.1} parent=1 // pred_region
      %s14 = ssub.s32 256, 256
      %15 = vsyncadd [#allocation3], %s14
      %s16 = sshll.u32 [#allocation2], 4
      %s17 = int_to_ptr.vmem [resolvable:$true] %s16
      %22 = dma.hbm_to_vmem [thread:$0]  %s0, 256, %s17, [#allocation3], 128, 128, 8
    $region5: #{tpu_custom_call.1} parent=1 // pred_fallthru
      _
    // Predicated region
    $region6: #{tpu_custom_call.1} parent=1 // pred_check
      _
    $region7: #{tpu_custom_call.1} parent=1 // pred_check_branch
      %24 = sbr.rel (0) target = $region9
    $region8: #{tpu_custom_call.1} parent=1 // pred_region
      _
    $region9: #{tpu_custom_call.1} parent=1 // pred_fallthru
      _
    // Predicated region
    $region10: #{tpu_custom_call.1} parent=1 // pred_check
      _
    $region11: #{tpu_custom_call.1} parent=1 // pred_check_branch
      %26 = sbr.rel (0) target = $region13
    $region12: #{tpu_custom_call.1} parent=1 // pred_region
      _
    $region13: #{tpu_custom_call.1} parent=1 // pred_fallthru
      _
    // Predicated region
    $region14: #{tpu_custom_call.1} parent=1 // pred_check
      _
    $region15: #{tpu_custom_call.1} parent=1 // pred_check_branch
      %28 = sbr.rel (0) target = $region17
    $region16: #{tpu_custom_call.1} parent=1 // pred_region
      _
    $region17: #{tpu_custom_call.1} parent=1 // pred_fallthru
      _
    // Predicated region
    $region18: #{tpu_custom_call.1} parent=1 // pred_check
      _
    $region19: #{tpu_custom_call.1} parent=1 // pred_check_branch
      %30 = sbr.rel (0) target = $region21
    $region20: #{tpu_custom_call.1} parent=1 // pred_region
      %31 = dma.done [#allocation3], 256
    $region21: #{tpu_custom_call.1} parent=1 // pred_fallthru
      _
    %v33 = vld [vmem:[#allocation2] sm:$0xff]
    %v34 = vld [vmem:[#allocation2 + $0x8] sm:$0xff]
    %v35 = vlaneseq
    %v36 = vand.u32 %v35, 127
    %vm37 = vcmp.lt.s32.totalorder %v36, 16
    %v38 = vsel %vm37, %v33, -1e+30
    %v39 = vsel %vm37, %v34, -1e+30
    %40 = vmax.xlane.f32.xlu0 %v38
    %v41 = vpop.xlane.xlu0 %40
    %42 = vmax.xlane.f32.xlu0 %v39
    %v43 = vpop.xlane.xlu0 %42
    %v44 = vsub.f32 %v38, %v41
    %v45 = vsub.f32 %v39, %v43
    %v46 = vmul.f32 %v44, 1.442695
    %v47 = vpow.pop %v46
    %v48 = vmul.f32 %v45, 1.442695
    %v49 = vpow.pop %v48
    %50 = vadd.xlane.f32.xlu0 %v47
    %v51 = vpop.xlane.xlu0 %50
    %52 = vadd.xlane.f32.xlu0 %v49
    %v53 = vpop.xlane.xlu0 %52
    %v54 = vrcp.pop %v51
    %v55 = vrcp.pop %v53
    %v56 = vmul.f32 %v47, %v54
    %v57 = vmul.f32 %v49, %v55
    %v58 = vsel %vm37, %v56, %v33
    %v59 = vsel %vm37, %v57, %v34
    %v60 = vpack.c.bf16 %v59, %v58
    %v61 = vlaneseq
    %v62 = vshrl.u32 %v61, 7
    %v63 = vadd.s32 %v62, 8
    %v64 = vadd.s32 %v62, 16
    %v65 = vadd.s32 %v62, 24
    %v66 = vadd.s32 %v62, 32
    %v67 = vadd.s32 %v62, 40
    %v68 = vadd.s32 %v62, 48
    %v69 = vadd.s32 %v62, 56
    %v70 = vadd.s32 %v62, 64
    %v71 = vadd.s32 %v62, 72
    %v72 = vadd.s32 %v62, 80
    %v73 = vadd.s32 %v62, 88
    %v74 = vadd.s32 %v62, 96
    %v75 = vadd.s32 %v62, 104
    %v76 = vadd.s32 %v62, 112
    %v77 = vadd.s32 %v62, 120
    %v78 = vld [vmem:[%s1] sm:$0x1]
    %v79 = vlaneseq
    %v80 = vshrl.u32 %v79, 7
    %v81 = vsub.s32 0, %v80
    %v82 = vrot.slane %v78, %v81
    %vm83 = vcmp.eq.s32.totalorder %v62, %v82
    %vm84 = vcmp.eq.s32.totalorder %v63, %v82
    %vm85 = vcmp.eq.s32.totalorder %v64, %v82
    %vm86 = vcmp.eq.s32.totalorder %v65, %v82
    %vm87 = vcmp.eq.s32.totalorder %v66, %v82
    %vm88 = vcmp.eq.s32.totalorder %v67, %v82
    %vm89 = vcmp.eq.s32.totalorder %v68, %v82
    %vm90 = vcmp.eq.s32.totalorder %v69, %v82
    %vm91 = vcmp.eq.s32.totalorder %v70, %v82
    %vm92 = vcmp.eq.s32.totalorder %v71, %v82
    %vm93 = vcmp.eq.s32.totalorder %v72, %v82
    %vm94 = vcmp.eq.s32.totalorder %v73, %v82
    %vm95 = vcmp.eq.s32.totalorder %v74, %v82
    %vm96 = vcmp.eq.s32.totalorder %v75, %v82
    %vm97 = vcmp.eq.s32.totalorder %v76, %v82
    %vm98 = vcmp.eq.s32.totalorder %v77, %v82
    %v99 = vsel %vm83, -1.0, 0.0
    %v100 = vsel %vm84, -1.0, 0.0
    %v101 = vsel %vm85, -1.0, 0.0
    %v102 = vsel %vm86, -1.0, 0.0
    %v103 = vsel %vm87, -1.0, 0.0
    %v104 = vsel %vm88, -1.0, 0.0
    %v105 = vsel %vm89, -1.0, 0.0
    %v106 = vsel %vm90, -1.0, 0.0
    %v107 = vsel %vm91, -1.0, 0.0
    %v108 = vsel %vm92, -1.0, 0.0
    %v109 = vsel %vm93, -1.0, 0.0
    %v110 = vsel %vm94, -1.0, 0.0
    %v111 = vsel %vm95, -1.0, 0.0
    %v112 = vsel %vm96, -1.0, 0.0
    %v113 = vsel %vm97, -1.0, 0.0
    %v114 = vsel %vm98, -1.0, 0.0
    %v115 = vld [vmem:[%s2] sm:$0x1]
    %v116 = vlaneseq
    %v117 = vshrl.u32 %v116, 7
    %v118 = vsub.s32 0, %v117
    %v119 = vrot.slane %v115, %v118
    %vm120 = vcmp.eq.s32.totalorder %v62, %v119
    %vm121 = vcmp.eq.s32.totalorder %v63, %v119
    %vm122 = vcmp.eq.s32.totalorder %v64, %v119
    %vm123 = vcmp.eq.s32.totalorder %v65, %v119
    %vm124 = vcmp.eq.s32.totalorder %v66, %v119
    %vm125 = vcmp.eq.s32.totalorder %v67, %v119
    %vm126 = vcmp.eq.s32.totalorder %v68, %v119
    %vm127 = vcmp.eq.s32.totalorder %v69, %v119
    %vm128 = vcmp.eq.s32.totalorder %v70, %v119
    %vm129 = vcmp.eq.s32.totalorder %v71, %v119
    %vm130 = vcmp.eq.s32.totalorder %v72, %v119
    %vm131 = vcmp.eq.s32.totalorder %v73, %v119
    %vm132 = vcmp.eq.s32.totalorder %v74, %v119
    %vm133 = vcmp.eq.s32.totalorder %v75, %v119
    %vm134 = vcmp.eq.s32.totalorder %v76, %v119
    %vm135 = vcmp.eq.s32.totalorder %v77, %v119
    %v136 = vsel %vm120, -1.0, 0.0
    %v137 = vsel %vm121, -1.0, 0.0
    %v138 = vsel %vm122, -1.0, 0.0
    %v139 = vsel %vm123, -1.0, 0.0
    %v140 = vsel %vm124, -1.0, 0.0
    %v141 = vsel %vm125, -1.0, 0.0
    %v142 = vsel %vm126, -1.0, 0.0
    %v143 = vsel %vm127, -1.0, 0.0
    %v144 = vsel %vm128, -1.0, 0.0
    %v145 = vsel %vm129, -1.0, 0.0
    %v146 = vsel %vm130, -1.0, 0.0
    %v147 = vsel %vm131, -1.0, 0.0
    %v148 = vsel %vm132, -1.0, 0.0
    %v149 = vsel %vm133, -1.0, 0.0
    %v150 = vsel %vm134, -1.0, 0.0
    %v151 = vsel %vm135, -1.0, 0.0
    %v152 = vadd.f32 %v99, %v136
    %v153 = vadd.f32 %v100, %v137
    %v154 = vadd.f32 %v101, %v138
    %v155 = vadd.f32 %v102, %v139
    %v156 = vadd.f32 %v103, %v140
    %v157 = vadd.f32 %v104, %v141
    %v158 = vadd.f32 %v105, %v142
    %v159 = vadd.f32 %v106, %v143
    %v160 = vadd.f32 %v107, %v144
    %v161 = vadd.f32 %v108, %v145
    %v162 = vadd.f32 %v109, %v146
    %v163 = vadd.f32 %v110, %v147
    %v164 = vadd.f32 %v111, %v148
    %v165 = vadd.f32 %v112, %v149
    %v166 = vadd.f32 %v113, %v150
    %v167 = vadd.f32 %v114, %v151
    %v168 = vld [vmem:[%s3] sm:$0x1]
    %v169 = vlaneseq
    %v170 = vshrl.u32 %v169, 7
    %v171 = vsub.s32 0, %v170
    %v172 = vrot.slane %v168, %v171
    %vm173 = vcmp.eq.s32.totalorder %v62, %v172
    %vm174 = vcmp.eq.s32.totalorder %v63, %v172
    %vm175 = vcmp.eq.s32.totalorder %v64, %v172
    %vm176 = vcmp.eq.s32.totalorder %v65, %v172
    %vm177 = vcmp.eq.s32.totalorder %v66, %v172
    %vm178 = vcmp.eq.s32.totalorder %v67, %v172
    %vm179 = vcmp.eq.s32.totalorder %v68, %v172
    %vm180 = vcmp.eq.s32.totalorder %v69, %v172
    %vm181 = vcmp.eq.s32.totalorder %v70, %v172
    %vm182 = vcmp.eq.s32.totalorder %v71, %v172
    %vm183 = vcmp.eq.s32.totalorder %v72, %v172
    %vm184 = vcmp.eq.s32.totalorder %v73, %v172
    %vm185 = vcmp.eq.s32.totalorder %v74, %v172
    %vm186 = vcmp.eq.s32.totalorder %v75, %v172
    %vm187 = vcmp.eq.s32.totalorder %v76, %v172
    %vm188 = vcmp.eq.s32.totalorder %v77, %v172
    %v189 = vsel %vm173, -1.0, 0.0
    %v190 = vsel %vm174, -1.0, 0.0
    %v191 = vsel %vm175, -1.0, 0.0
    %v192 = vsel %vm176, -1.0, 0.0
    %v193 = vsel %vm177, -1.0, 0.0
    %v194 = vsel %vm178, -1.0, 0.0
    %v195 = vsel %vm179, -1.0, 0.0
    %v196 = vsel %vm180, -1.0, 0.0
    %v197 = vsel %vm181, -1.0, 0.0
    %v198 = vsel %vm182, -1.0, 0.0
    %v199 = vsel %vm183, -1.0, 0.0
    %v200 = vsel %vm184, -1.0, 0.0
    %v201 = vsel %vm185, -1.0, 0.0
    %v202 = vsel %vm186, -1.0, 0.0
    %v203 = vsel %vm187, -1.0, 0.0
    %v204 = vsel %vm188, -1.0, 0.0
    %v205 = vadd.f32 %v152, %v189
    %v206 = vadd.f32 %v153, %v190
    %v207 = vadd.f32 %v154, %v191
    %v208 = vadd.f32 %v155, %v192
    %v209 = vadd.f32 %v156, %v193
    %v210 = vadd.f32 %v157, %v194
    %v211 = vadd.f32 %v158, %v195
    %v212 = vadd.f32 %v159, %v196
    %v213 = vadd.f32 %v160, %v197
    %v214 = vadd.f32 %v161, %v198
    %v215 = vadd.f32 %v162, %v199
    %v216 = vadd.f32 %v163, %v200
    %v217 = vadd.f32 %v164, %v201
    %v218 = vadd.f32 %v165, %v202
    %v219 = vadd.f32 %v166, %v203
    %v220 = vadd.f32 %v167, %v204
    %v221 = vpack.c.bf16 %v206, %v205
    %v222 = vpack.c.bf16 %v208, %v207
    %v223 = vpack.c.bf16 %v210, %v209
    %v224 = vpack.c.bf16 %v212, %v211
    %v225 = vpack.c.bf16 %v214, %v213
    %v226 = vpack.c.bf16 %v216, %v215
    %v227 = vpack.c.bf16 %v218, %v217
    %v228 = vpack.c.bf16 %v220, %v219
    %229 = vmatprep.subr.bf16.mxu0 0
    %230 = vmatpush1.bf16.msra.mxu0 %v221
    %231 = vmatprep.subr.bf16.mxu0 0
    %232 = vmatpush1.bf16.msra.mxu0 %v222
    %233 = vmatprep.subr.bf16.mxu0 0
    %234 = vmatpush1.bf16.msra.mxu0 %v223
    %235 = vmatprep.subr.bf16.mxu0 0
    %236 = vmatpush1.bf16.msra.mxu0 %v224
    %237 = vmatprep.subr.bf16.mxu0 0
    %238 = vmatpush1.bf16.msra.mxu0 %v225
    %239 = vmatprep.subr.bf16.mxu0 0
    %240 = vmatpush1.bf16.msra.mxu0 %v226
    %241 = vmatprep.subr.bf16.mxu0 0
    %242 = vmatpush1.bf16.msra.mxu0 %v227
    %243 = vmatprep.subr.bf16.mxu0 0
    %244 = vmatpush1.bf16.msra.mxu0 %v228
    %245 = vmatprep.subr.bf16.mxu0 0
    %246 = vmatpush1.bf16.msra.mxu0 0
    %247 = vmatprep.subr.bf16.mxu0 0
    %248 = vmatpush1.bf16.msra.mxu0 0
    %249 = vmatprep.subr.bf16.mxu0 0
    %250 = vmatpush1.bf16.msra.mxu0 0
    %251 = vmatprep.subr.bf16.mxu0 0
    %252 = vmatpush1.bf16.msra.mxu0 0
    %253 = vmatprep.subr.bf16.mxu0 0
    %254 = vmatpush1.bf16.msra.mxu0 0
    %255 = vmatprep.subr.bf16.mxu0 0
    %256 = vmatpush1.bf16.msra.mxu0 0
    %257 = vmatprep.subr.bf16.mxu0 0
    %258 = vmatpush1.bf16.msra.mxu0 0
    %259 = vmatprep.subr.bf16.mxu0 0
    %260 = vmatpush1.bf16.msra.mxu0 0
    %261 = vmatprep.mubr.bf16.mxu0 0
    %262 = vmatmul.mubr.bf16.gmra.mrb[0].mxu0 %v60
    %v263 = vpop.f32.mrb[0].mxu0
    %v264 = vadd.f32 0.0, %v263
    %v265 = vpop.f32.mrb[0].mxu0
    %v266 = vpop.f32.mrb[0].mxu0
    %v267 = vadd.f32 0.0, %v266
    %v268 = vpop.f32.mrb[0].mxu0
    %269 = vdwg.mxu0
    %270 = vst [vmem:[#allocation5] sm:$0xff] %v264
    %271 = vst [vmem:[#allocation5 + $0x8] sm:$0xff] %v267
    // Predicated region
    $region22: #{tpu_custom_call.1} parent=1 // pred_check
      _
    $region23: #{tpu_custom_call.1} parent=1 // pred_check_branch
      %273 = sbr.rel (0) target = $region25
    $region24: #{tpu_custom_call.1} parent=1 // pred_region
      %s275 = ssub.s32 256, 256
      %276 = vsyncadd [#allocation4], %s275
      %s277 = sshll.u32 [#allocation5], 4
      %s278 = int_to_ptr.vmem [resolvable:$true] %s277
      %283 = dma.vmem_to_hbm [thread:$0]  %s278, 256, %s4, [#allocation4], 128, 128, 8
    $region25: #{tpu_custom_call.1} parent=1 // pred_fallthru
      _
    // Predicated region
    $region26: #{tpu_custom_call.1} parent=1 // pred_check
      _
    $region27: #{tpu_custom_call.1} parent=1 // pred_check_branch
      %285 = sbr.rel (0) target = $region29
    $region28: #{tpu_custom_call.1} parent=1 // pred_region
      %286 = dma.done [#allocation4], 256
    $region29: #{tpu_custom_call.1} parent=1 // pred_fallthru
      _
    %287 = vsyncpa [#allocation3], 1
    %288 = vsyncpa [#allocation4], 1

</llo_original>
